<compile_context>
chip_gen: v6e
topology: v6e:2x2x1
jax: 0.10.0
libtpu: 0.0.40
codegen_flags: <defaults>
</compile_context>

<pallas_src>
import functools

import jax
import jax.numpy as jnp
from jax.experimental import pallas as pl
from jax.experimental.pallas import tpu as pltpu


def _final_layer_kernel(shift_ref, scale1_ref, x_ref, wl_ref, bl_ref, o_ref,
                        *, eps):
    # shift_ref, scale1_ref: (1, 1, H)   x_ref: (1, TN, H)
    # wl_ref: (H, O_pad)   bl_ref: (1, O_pad)   o_ref: (1, TN, O_pad)
    x = x_ref[0].astype(jnp.float32)                       # (TN, H) f32 stats

    # --- LayerNorm (elementwise_affine=False), one-pass statistics ---
    mean = jnp.mean(x, axis=-1, keepdims=True)             # (TN, 1)
    mean_sq = jnp.mean(x * x, axis=-1, keepdims=True)      # (TN, 1)
    var = mean_sq - mean * mean
    inv = jax.lax.rsqrt(var + eps)                         # (TN, 1)

    shift = shift_ref[0].astype(jnp.float32)               # (1, H)
    scale1 = scale1_ref[0].astype(jnp.float32)             # (1, H) == 1+scale

    # --- fused normalize + modulate feeding the MXU (f32 accumulation) ---
    xm = ((x - mean) * inv * scale1 + shift).astype(wl_ref.dtype)
    out = jnp.dot(xm, wl_ref[...], preferred_element_type=jnp.float32)
    o_ref[0] = (out + bl_ref[...]).astype(o_ref.dtype)


def pad_linear_params(w_lin, b_lin):
    """One-time parameter prep: pad the final Linear to a lane-dense output
    width (multiple of 128) so the kernel's stores are full-width unmasked
    vst.  Returns (w_lin_pad, b_lin_pad(1, O_pad), out_features)."""
    O = w_lin.shape[1]
    O_pad = ((O + 127) // 128) * 128
    if O_pad != O:
        w_lin = jnp.pad(w_lin, ((0, 0), (0, O_pad - O)))
        b_lin = jnp.pad(b_lin, (0, O_pad - O))
    return w_lin, b_lin.reshape(1, O_pad), O


def _choose_tile_and_vmem(B, N, H, O_pad, x_itemsize, w_itemsize, tn_max):
    """Pick the token tile TN and an explicit scoped-VMEM limit."""
    MIB = 1024 * 1024
    vmem_target = 40 * MIB      # leaves headroom under v7x's 64 MiB physical
    vmem_cap = 48 * MIB

    # Single-buffered residents: W_lin, b_lin, shift, 1+scale.
    fixed = H * O_pad * w_itemsize + O_pad * 4 + 2 * H * 4

    def step_bytes(tn):
        x_buf = 2 * tn * H * x_itemsize          # double-buffered input tile
        o_buf = 2 * tn * O_pad * x_itemsize      # double-buffered output tile
        tmp = 3 * tn * H * 4                     # live f32 LN temporaries
        return x_buf + o_buf + tmp

    tn = min(tn_max, N)
    if tn < N:
        tn = max(8, (tn // 8) * 8)               # (8, 128) sublane rule
    while tn > 8 and fixed + step_bytes(tn) > vmem_target:
        tn = max(8, ((tn // 2) // 8) * 8)
    # Keep >= 2 parallel grid steps so both v7x TensorCores get work.
    while B * pl.cdiv(N, tn) < 2 and tn > 8:
        tn = max(8, ((tn // 2) // 8) * 8)

    est = fixed + step_bytes(tn)
    vmem_limit = int(min(vmem_cap, max(1.5 * est, 32 * MIB)))
    return tn, vmem_limit


def final_layer_pallas(x, c, w_ada, b_ada, w_lin_pad, b_lin_pad, *,
                       out_features=None, eps=1e-6, tn_max=1024,
                       slice_output=True):
    """x: (B, N, H), c: (B, H).  w_ada: (H, 2H), b_ada: (2H,) are transposed
    PyTorch Linear weights.  w_lin_pad (H, O_pad), b_lin_pad (1, O_pad) come
    from pad_linear_params (padding hoisted out of the per-call path)."""
    B, N, H = x.shape
    O_pad = w_lin_pad.shape[1]
    O = O_pad if out_features is None else out_features

    # adaLN modulation hoisted out of the kernel: only B*H*2H FLOPs, keeps the
    # (H, 2H) weight out of VMEM and off a degenerate M=1 MXU matmul.
    c_silu = c * jax.nn.sigmoid(c)
    mod = c_silu @ w_ada + b_ada                           # (B, 2H)
    shift = mod[:, :H].reshape(B, 1, H)
    scale1 = (1.0 + mod[:, H:]).reshape(B, 1, H)

    TN, vmem_limit = _choose_tile_and_vmem(
        B, N, H, O_pad, x.dtype.itemsize, w_lin_pad.dtype.itemsize, tn_max)
    grid = (B, pl.cdiv(N, TN))

    kernel = functools.partial(_final_layer_kernel, eps=eps)

    def _call(const_mode):
        return pl.pallas_call(
            kernel,
            out_shape=jax.ShapeDtypeStruct((B, N, O_pad), x.dtype),
            grid_spec=pltpu.PrefetchScalarGridSpec(
                num_scalar_prefetch=0,
                grid=grid,
                in_specs=[
                    pl.BlockSpec((1, 1, H), lambda b, n: (b, 0, 0),
                                 pipeline_mode=const_mode),       # shift
                    pl.BlockSpec((1, 1, H), lambda b, n: (b, 0, 0),
                                 pipeline_mode=const_mode),       # 1 + scale
                    pl.BlockSpec((1, TN, H), lambda b, n: (b, n, 0)),   # x
                    pl.BlockSpec((H, O_pad), lambda b, n: (0, 0),
                                 pipeline_mode=const_mode),       # W_lin
                    pl.BlockSpec((1, O_pad), lambda b, n: (0, 0),
                                 pipeline_mode=const_mode),       # b_lin
                ],
                out_specs=pl.BlockSpec((1, TN, O_pad), lambda b, n: (b, n, 0)),
            ),
            compiler_params=pltpu.CompilerParams(
                dimension_semantics=("parallel", "parallel"),
                vmem_limit_bytes=vmem_limit),
        )(shift, scale1, x, w_lin_pad, b_lin_pad)

    try:
        # Constant-index inputs are fetched once; single-buffer them so their
        # VMEM goes into a larger x tile instead of a dead second buffer.
        out_padded = _call(pl.Buffered(1))
    except Exception:
        # Fallback if this JAX version rejects Buffered(1): default
        # double-buffering is functionally identical, just uses more VMEM.
        out_padded = _call(None)

    if slice_output and O != O_pad:
        # NOTE: in production prefer slice_output=False and hand the padded
        # (B, N, O_pad) tensor straight to unpatchify — this slice is an
        # extra HBM read+write pass of the whole output.
        return out_padded[:, :, :O]
    return out_padded


def final_layer_ref(x, c, w_ada, b_ada, w_lin, b_lin, *, eps=1e-6):
    """Plain-JAX reference mirroring the PyTorch forward."""
    c_silu = c * jax.nn.sigmoid(c)
    mod = c_silu @ w_ada + b_ada
    H = x.shape[-1]
    shift, scale = mod[:, :H], mod[:, H:]
    mean = jnp.mean(x, axis=-1, keepdims=True)
    var = jnp.mean((x - mean) ** 2, axis=-1, keepdims=True)
    xn = (x - mean) / jnp.sqrt(var + eps)
    xm = xn * (1.0 + scale[:, None, :]) + shift[:, None, :]
    return xm @ w_lin + b_lin


if __name__ == "__main__":
    # Small, module-consistent shapes.
    B, N = 2, 8                 # batch, tokens
    hidden_size = 32
    patch_size = 2
    out_channels = 4
    O = patch_size * patch_size * out_channels   # 16

    key = jax.random.PRNGKey(0)
    kx, kc, kwa, kba, kwl, kbl = jax.random.split(key, 6)

    x = jax.random.normal(kx, (B, N, hidden_size), dtype=jnp.float32)
    c = jax.random.normal(kc, (B, hidden_size), dtype=jnp.float32)

    # Deterministic synthetic parameters (stored as (in, out) = transposed
    # PyTorch Linear weights).
    w_ada = jax.random.normal(kwa, (hidden_size, 2 * hidden_size),
                              dtype=jnp.float32) * 0.02
    b_ada = jax.random.normal(kba, (2 * hidden_size,), dtype=jnp.float32) * 0.02
    w_lin = jax.random.normal(kwl, (hidden_size, O), dtype=jnp.float32) * 0.02
    b_lin = jax.random.normal(kbl, (O,), dtype=jnp.float32) * 0.02

    # One-time parameter prep (lane-dense padding hoisted out of the call).
    w_lin_pad, b_lin_pad, out_features = pad_linear_params(w_lin, b_lin)

    out = final_layer_pallas(x, c, w_ada, b_ada, w_lin_pad, b_lin_pad,
                             out_features=out_features)
    out = jax.block_until_ready(out)

    ref = final_layer_ref(x, c, w_ada, b_ada, w_lin, b_lin)
    assert out.shape == (B, N, O)
    assert jnp.allclose(out, ref, atol=1e-3, rtol=1e-3), "mismatch vs reference"

    print("KERNEL_OK")
</pallas_src>

<mosaic_0001>
module attributes {stable_mosaic.version = 11 : i64} {
  func.func @_final_layer_kernel(%arg0: i32, %arg1: i32, %arg2: memref<1x1x32xf32, #tpu.memory_space<vmem>>, %arg3: memref<1x1x32xf32, #tpu.memory_space<vmem>>, %arg4: memref<1x8x32xf32, #tpu.memory_space<vmem>>, %arg5: memref<32x128xf32, #tpu.memory_space<vmem>>, %arg6: memref<1x128xf32, #tpu.memory_space<vmem>>, %arg7: memref<1x8x128xf32, #tpu.memory_space<vmem>>) attributes {dimension_semantics = [#tpu.dimension_semantics<parallel>, #tpu.dimension_semantics<parallel>], iteration_bounds = array<i64: 2, 1>, scalar_prefetch = 0 : i64, scratch_operands = 0 : i64, tpu.core_type = #tpu.core_type<tc>, window_params = [{pipeline_mode = #tpu.pipeline_mode<synchronous>, transform_indices = @transform_0, window_bounds = array<i64: 1, 1, 32>}, {pipeline_mode = #tpu.pipeline_mode<synchronous>, transform_indices = @transform_1, window_bounds = array<i64: 1, 1, 32>}, {transform_indices = @transform_2, window_bounds = array<i64: 1, 8, 32>}, {pipeline_mode = #tpu.pipeline_mode<synchronous>, transform_indices = @transform_3, window_bounds = array<i64: 32, 128>}, {pipeline_mode = #tpu.pipeline_mode<synchronous>, transform_indices = @transform_4, window_bounds = array<i64: 1, 128>}, {transform_indices = @transform_5, window_bounds = array<i64: 1, 8, 128>}]} {
    %c0 = arith.constant 0 : index
    %c0_0 = arith.constant 0 : index
    %c0_1 = arith.constant 0 : index
    %0 = vector.load %arg4[%c0, %c0_0, %c0_1] : memref<1x8x32xf32, #tpu.memory_space<vmem>>, vector<1x8x32xf32>
    %1 = vector.shape_cast %0 : vector<1x8x32xf32> to vector<8x32xf32>
    %cst = arith.constant dense<0.000000e+00> : vector<8xf32>
    %2 = vector.multi_reduction <add>, %1, %cst [1] : vector<8x32xf32> to vector<8xf32>
    %3 = vector.shape_cast %2 : vector<8xf32> to vector<8x1xf32>
    %cst_2 = arith.constant 3.200000e+01 : f32
    %4 = vector.broadcast %cst_2 : f32 to vector<8x1xf32>
    %5 = arith.divf %3, %4 : vector<8x1xf32>
    %6 = arith.mulf %1, %1 : vector<8x32xf32>
    %cst_3 = arith.constant dense<0.000000e+00> : vector<8xf32>
    %7 = vector.multi_reduction <add>, %6, %cst_3 [1] : vector<8x32xf32> to vector<8xf32>
    %8 = vector.shape_cast %7 : vector<8xf32> to vector<8x1xf32>
    %cst_4 = arith.constant 3.200000e+01 : f32
    %9 = vector.broadcast %cst_4 : f32 to vector<8x1xf32>
    %10 = arith.divf %8, %9 : vector<8x1xf32>
    %11 = arith.mulf %5, %5 : vector<8x1xf32>
    %12 = arith.subf %10, %11 : vector<8x1xf32>
    %cst_5 = arith.constant 9.99999997E-7 : f32
    %13 = vector.broadcast %cst_5 : f32 to vector<8x1xf32>
    %14 = arith.addf %12, %13 : vector<8x1xf32>
    %15 = math.rsqrt %14 : vector<8x1xf32>
    %c0_6 = arith.constant 0 : index
    %c0_7 = arith.constant 0 : index
    %c0_8 = arith.constant 0 : index
    %16 = vector.load %arg2[%c0_6, %c0_7, %c0_8] : memref<1x1x32xf32, #tpu.memory_space<vmem>>, vector<1x1x32xf32>
    %17 = vector.shape_cast %16 : vector<1x1x32xf32> to vector<1x32xf32>
    %c0_9 = arith.constant 0 : index
    %c0_10 = arith.constant 0 : index
    %c0_11 = arith.constant 0 : index
    %18 = vector.load %arg3[%c0_9, %c0_10, %c0_11] : memref<1x1x32xf32, #tpu.memory_space<vmem>>, vector<1x1x32xf32>
    %19 = vector.shape_cast %18 : vector<1x1x32xf32> to vector<1x32xf32>
    %20 = vector.broadcast %5 : vector<8x1xf32> to vector<8x32xf32>
    %21 = arith.subf %1, %20 : vector<8x32xf32>
    %22 = vector.broadcast %15 : vector<8x1xf32> to vector<8x32xf32>
    %23 = arith.mulf %21, %22 : vector<8x32xf32>
    %24 = vector.broadcast %19 : vector<1x32xf32> to vector<8x32xf32>
    %25 = arith.mulf %23, %24 : vector<8x32xf32>
    %26 = vector.broadcast %17 : vector<1x32xf32> to vector<8x32xf32>
    %27 = arith.addf %25, %26 : vector<8x32xf32>
    %c0_12 = arith.constant 0 : index
    %c0_13 = arith.constant 0 : index
    %28 = vector.load %arg5[%c0_12, %c0_13] : memref<32x128xf32, #tpu.memory_space<vmem>>, vector<32x128xf32>
    %cst_14 = arith.constant dense<0.000000e+00> : vector<8x128xf32>
    %29 = tpu.matmul %27, %28, %cst_14 {dimension_numbers = #tpu.dot_dimension_numbers<[1], [0], [0], [1], [0, 0, 1, 1], [], []>} : vector<8x32xf32>, vector<32x128xf32>, vector<8x128xf32> -> vector<8x128xf32>
    %c0_15 = arith.constant 0 : index
    %c0_16 = arith.constant 0 : index
    %30 = vector.load %arg6[%c0_15, %c0_16] : memref<1x128xf32, #tpu.memory_space<vmem>>, vector<1x128xf32>
    %31 = vector.broadcast %30 : vector<1x128xf32> to vector<8x128xf32>
    %32 = arith.addf %29, %31 : vector<8x128xf32>
    %c0_17 = arith.constant 0 : index
    %c0_18 = arith.constant 0 : index
    %c0_19 = arith.constant 0 : index
    %33 = vector.load %arg7[%c0_17, %c0_18, %c0_19] : memref<1x8x128xf32, #tpu.memory_space<vmem>>, vector<1x8x128xf32>
    %34 = vector.shape_cast %33 : vector<1x8x128xf32> to vector<8x128xf32>
    %35 = vector.shape_cast %32 : vector<8x128xf32> to vector<1x8x128xf32>
    tpu.vector_store %arg7[%c0_17, %c0_18, %c0_19], %35 {strides = array<i32>} : memref<1x8x128xf32, #tpu.memory_space<vmem>>, vector<1x8x128xf32>,
    return
  }
  func.func @transform_0(%arg0: i32, %arg1: i32) -> (i32, i32, i32) {
    %c0_i32 = arith.constant 0 : i32
    %c0_i32_0 = arith.constant 0 : i32
    %c0_i32_1 = arith.constant 0 : i32
    return %arg0, %c0_i32, %c0_i32_0 : i32, i32, i32
  }
  func.func @transform_1(%arg0: i32, %arg1: i32) -> (i32, i32, i32) {
    %c0_i32 = arith.constant 0 : i32
    %c0_i32_0 = arith.constant 0 : i32
    %c0_i32_1 = arith.constant 0 : i32
    return %arg0, %c0_i32, %c0_i32_0 : i32, i32, i32
  }
  func.func @transform_2(%arg0: i32, %arg1: i32) -> (i32, i32, i32) {
    %c0_i32 = arith.constant 0 : i32
    %c0_i32_0 = arith.constant 0 : i32
    return %arg0, %arg1, %c0_i32 : i32, i32, i32
  }
  func.func @transform_3(%arg0: i32, %arg1: i32) -> (i32, i32) {
    %c0_i32 = arith.constant 0 : i32
    %c0_i32_0 = arith.constant 0 : i32
    %c0_i32_1 = arith.constant 0 : i32
    return %c0_i32, %c0_i32_0 : i32, i32
  }
  func.func @transform_4(%arg0: i32, %arg1: i32) -> (i32, i32) {
    %c0_i32 = arith.constant 0 : i32
    %c0_i32_0 = arith.constant 0 : i32
    %c0_i32_1 = arith.constant 0 : i32
    return %c0_i32, %c0_i32_0 : i32, i32
  }
  func.func @transform_5(%arg0: i32, %arg1: i32) -> (i32, i32, i32) {
    %c0_i32 = arith.constant 0 : i32
    %c0_i32_0 = arith.constant 0 : i32
    return %arg0, %arg1, %c0_i32 : i32, i32, i32
  }
}

module attributes {stable_mosaic.version = 11 : i64} {
  func.func @_final_layer_kernel(%arg0: i32, %arg1: i32, %arg2: memref<1x1x32xf32, #tpu.memory_space<vmem>>, %arg3: memref<1x1x32xf32, #tpu.memory_space<vmem>>, %arg4: memref<1x8x32xf32, #tpu.memory_space<vmem>>, %arg5: memref<32x128xf32, #tpu.memory_space<vmem>>, %arg6: memref<1x128xf32, #tpu.memory_space<vmem>>, %arg7: memref<1x8x128xf32, #tpu.memory_space<vmem>>) attributes {dimension_semantics = [#tpu.dimension_semantics<parallel>, #tpu.dimension_semantics<parallel>], iteration_bounds = array<i64: 2, 1>, scalar_prefetch = 0 : i64, scratch_operands = 0 : i64, tpu.core_type = #tpu.core_type<tc>, window_params = [{transform_indices = @transform_0, window_bounds = array<i64: 1, 1, 32>}, {transform_indices = @transform_1, window_bounds = array<i64: 1, 1, 32>}, {transform_indices = @transform_2, window_bounds = array<i64: 1, 8, 32>}, {pipeline_mode = #tpu.pipeline_mode<synchronous>, transform_indices = @transform_3, window_bounds = array<i64: 32, 128>}, {pipeline_mode = #tpu.pipeline_mode<synchronous>, transform_indices = @transform_4, window_bounds = array<i64: 1, 128>}, {transform_indices = @transform_5, window_bounds = array<i64: 1, 8, 128>}]} {
    %c0 = arith.constant 0 : index
    %c0_0 = arith.constant 0 : index
    %c0_1 = arith.constant 0 : index
    %0 = vector.load %arg4[%c0, %c0_0, %c0_1] : memref<1x8x32xf32, #tpu.memory_space<vmem>>, vector<1x8x32xf32>
    %1 = vector.shape_cast %0 : vector<1x8x32xf32> to vector<8x32xf32>
    %cst = arith.constant dense<0.000000e+00> : vector<8xf32>
    %2 = vector.multi_reduction <add>, %1, %cst [1] : vector<8x32xf32> to vector<8xf32>
    %3 = vector.shape_cast %2 : vector<8xf32> to vector<8x1xf32>
    %cst_2 = arith.constant 3.200000e+01 : f32
    %4 = vector.broadcast %cst_2 : f32 to vector<8x1xf32>
    %5 = arith.divf %3, %4 : vector<8x1xf32>
    %6 = arith.mulf %1, %1 : vector<8x32xf32>
    %cst_3 = arith.constant dense<0.000000e+00> : vector<8xf32>
    %7 = vector.multi_reduction <add>, %6, %cst_3 [1] : vector<8x32xf32> to vector<8xf32>
    %8 = vector.shape_cast %7 : vector<8xf32> to vector<8x1xf32>
    %cst_4 = arith.constant 3.200000e+01 : f32
    %9 = vector.broadcast %cst_4 : f32 to vector<8x1xf32>
    %10 = arith.divf %8, %9 : vector<8x1xf32>
    %11 = arith.mulf %5, %5 : vector<8x1xf32>
    %12 = arith.subf %10, %11 : vector<8x1xf32>
    %cst_5 = arith.constant 9.99999997E-7 : f32
    %13 = vector.broadcast %cst_5 : f32 to vector<8x1xf32>
    %14 = arith.addf %12, %13 : vector<8x1xf32>
    %15 = math.rsqrt %14 : vector<8x1xf32>
    %c0_6 = arith.constant 0 : index
    %c0_7 = arith.constant 0 : index
    %c0_8 = arith.constant 0 : index
    %16 = vector.load %arg2[%c0_6, %c0_7, %c0_8] : memref<1x1x32xf32, #tpu.memory_space<vmem>>, vector<1x1x32xf32>
    %17 = vector.shape_cast %16 : vector<1x1x32xf32> to vector<1x32xf32>
    %c0_9 = arith.constant 0 : index
    %c0_10 = arith.constant 0 : index
    %c0_11 = arith.constant 0 : index
    %18 = vector.load %arg3[%c0_9, %c0_10, %c0_11] : memref<1x1x32xf32, #tpu.memory_space<vmem>>, vector<1x1x32xf32>
    %19 = vector.shape_cast %18 : vector<1x1x32xf32> to vector<1x32xf32>
    %20 = vector.broadcast %5 : vector<8x1xf32> to vector<8x32xf32>
    %21 = arith.subf %1, %20 : vector<8x32xf32>
    %22 = vector.broadcast %15 : vector<8x1xf32> to vector<8x32xf32>
    %23 = arith.mulf %21, %22 : vector<8x32xf32>
    %24 = vector.broadcast %19 : vector<1x32xf32> to vector<8x32xf32>
    %25 = arith.mulf %23, %24 : vector<8x32xf32>
    %26 = vector.broadcast %17 : vector<1x32xf32> to vector<8x32xf32>
    %27 = arith.addf %25, %26 : vector<8x32xf32>
    %c0_12 = arith.constant 0 : index
    %c0_13 = arith.constant 0 : index
    %28 = vector.load %arg5[%c0_12, %c0_13] : memref<32x128xf32, #tpu.memory_space<vmem>>, vector<32x128xf32>
    %cst_14 = arith.constant dense<0.000000e+00> : vector<8x128xf32>
    %29 = tpu.matmul %27, %28, %cst_14 {dimension_numbers = #tpu.dot_dimension_numbers<[1], [0], [0], [1], [0, 0, 1, 1], [], []>} : vector<8x32xf32>, vector<32x128xf32>, vector<8x128xf32> -> vector<8x128xf32>
    %c0_15 = arith.constant 0 : index
    %c0_16 = arith.constant 0 : index
    %30 = vector.load %arg6[%c0_15, %c0_16] : memref<1x128xf32, #tpu.memory_space<vmem>>, vector<1x128xf32>
    %31 = vector.broadcast %30 : vector<1x128xf32> to vector<8x128xf32>
    %32 = arith.addf %29, %31 : vector<8x128xf32>
    %c0_17 = arith.constant 0 : index
    %c0_18 = arith.constant 0 : index
    %c0_19 = arith.constant 0 : index
    %33 = vector.load %arg7[%c0_17, %c0_18, %c0_19] : memref<1x8x128xf32, #tpu.memory_space<vmem>>, vector<1x8x128xf32>
    %34 = vector.shape_cast %33 : vector<1x8x128xf32> to vector<8x128xf32>
    %35 = vector.shape_cast %32 : vector<8x128xf32> to vector<1x8x128xf32>
    tpu.vector_store %arg7[%c0_17, %c0_18, %c0_19], %35 {strides = array<i32>} : memref<1x8x128xf32, #tpu.memory_space<vmem>>, vector<1x8x128xf32>,
    return
  }
  func.func @transform_0(%arg0: i32, %arg1: i32) -> (i32, i32, i32) {
    %c0_i32 = arith.constant 0 : i32
    %c0_i32_0 = arith.constant 0 : i32
    %c0_i32_1 = arith.constant 0 : i32
    return %arg0, %c0_i32, %c0_i32_0 : i32, i32, i32
  }
  func.func @transform_1(%arg0: i32, %arg1: i32) -> (i32, i32, i32) {
    %c0_i32 = arith.constant 0 : i32
    %c0_i32_0 = arith.constant 0 : i32
    %c0_i32_1 = arith.constant 0 : i32
    return %arg0, %c0_i32, %c0_i32_0 : i32, i32, i32
  }
  func.func @transform_2(%arg0: i32, %arg1: i32) -> (i32, i32, i32) {
    %c0_i32 = arith.constant 0 : i32
    %c0_i32_0 = arith.constant 0 : i32
    return %arg0, %arg1, %c0_i32 : i32, i32, i32
  }
  func.func @transform_3(%arg0: i32, %arg1: i32) -> (i32, i32) {
    %c0_i32 = arith.constant 0 : i32
    %c0_i32_0 = arith.constant 0 : i32
    %c0_i32_1 = arith.constant 0 : i32
    return %c0_i32, %c0_i32_0 : i32, i32
  }
  func.func @transform_4(%arg0: i32, %arg1: i32) -> (i32, i32) {
    %c0_i32 = arith.constant 0 : i32
    %c0_i32_0 = arith.constant 0 : i32
    %c0_i32_1 = arith.constant 0 : i32
    return %c0_i32, %c0_i32_0 : i32, i32
  }
  func.func @transform_5(%arg0: i32, %arg1: i32) -> (i32, i32, i32) {
    %c0_i32 = arith.constant 0 : i32
    %c0_i32_0 = arith.constant 0 : i32
    return %arg0, %arg1, %c0_i32 : i32, i32, i32
  }
}

</mosaic_0001>

<llo_original>
// kernel: tpu_custom_call.1
$region0: #{tpu_custom_call.1}
  #allocation0 [shape = 'u32[]', space=smem, size = 0x4, offset = 0x4, fixed_abs, tag = 'smem constant byte address 0x4 - core index']
  #allocation1 [shape = 'u32[144,128]{1,0:T(1,128)}', space=vmem, size = 0x12000, scoped, tag = 'internal scratch']
  %s0 = inlined_call_operand.hbm [shape: f32[2,1,32], index: 0, kind: input, shape index: {}]
  %s1 = inlined_call_operand.hbm [shape: f32[2,1,32], index: 1, kind: input, shape index: {}]
  %s2 = inlined_call_operand.hbm [shape: f32[2,8,32], index: 2, kind: input, shape index: {}]
  %s3 = inlined_call_operand.hbm [shape: f32[32,128], index: 3, kind: input, shape index: {}]
  %s4 = inlined_call_operand.vmem [shape: f32[1,128], index: 4, kind: input, shape index: {}]
  %s5 = inlined_call_operand.hbm [shape: f32[2,8,128], index: 5, kind: output, shape index: {}]
  %s6 = sld [smem:[#allocation0]]
  $region69: #{tpu_custom_call.1} parent=0
    _
  %s8 = ssub.s32 1, %s6
  %s9 = scalar_select 0, %s8, %s6
  $region1: #{tpu_custom_call.1} parent=0
    #allocation2 [shape = 'u8[512]{0}', space=vmem, size = 0x400, scoped, tag = 'input window, operand 0, single buffered']
    #allocation3 [shape = 's32[2]{0}', space=sflag, size = 0x8, scoped, tag = 'scoped memory for tpu_custom_call.1']
    #allocation4 [shape = 's32[2]{0}', space=sflag, size = 0x8, scoped, tag = 'scoped memory for tpu_custom_call.1']
    #allocation5 [shape = 'u8[512]{0}', space=vmem, size = 0x400, scoped, tag = 'input window, operand 1, single buffered']
    #allocation6 [shape = 's32[1]{0}', space=sflag, size = 0x4, scoped, tag = 'scoped memory for tpu_custom_call.1']
    #allocation7 [shape = 'u8[8192]{0}', space=vmem, size = 0x2000, scoped, tag = 'input window, operand 2']
    #allocation8 [shape = 'u8[16384]{0}', space=vmem, size = 0x4000, scoped, tag = 'input window, operand 3, single buffered']
    #allocation9 [shape = 'u8[8192]{0}', space=vmem, size = 0x2000, scoped, tag = 'output window, operand 0']
    %10 = vsyncpa [#allocation3], 0
    %11 = vsyncpa [#allocation6], 0
    %12 = vsyncpa [#allocation4], 0
    %s13 = scalar_lea.sflag [#allocation4], 1
    %14 = vsyncpa %s13, 0
    loop: start=0, step=1, limit=4
    $region2: #{tpu_custom_call.1} parent=1 // loop_pre_header
      _
    $region3: #{tpu_custom_call.1} parent=1 // loop_header
      %s16 = sphi 0, %s20
      %p17 = scmp.ge.s32.totalorder %s16, 4
      %s23 = sphi 0, %s35
      %s24 = sphi 0, %s31
      %s25 = sphi 0, %s23
      %s26 = sphi 0, %s24
      %s27 = sphi 0, %s25
      %s28 = sphi 0, %s26
      %s38 = sphi 0, %s40
      %s41 = sphi 0, %s38
      %s42 = sphi 0, %s41
      %s58 = sphi 0, %s42
      %s64 = sphi 0, %s66
      %s67 = sphi 0, %s64
      %s68 = sphi 0, %s67
      %s84 = sphi 0, %s68
      %s92 = sphi 0, %s94
      %s95 = sphi 0, %s92
      %s96 = sphi 0, %s95
      %s112 = sphi 0, %s96
      %s116 = sphi 0, %s116
      %s118 = sphi 0, %s116
      %s119 = sphi 0, %s118
      %s133 = sphi 0, %s119
      %s137 = sphi 0, %s137
      %s139 = sphi 0, %s137
      %s140 = sphi 0, %s139
      %s154 = sphi 0, %s140
      %s162 = sphi 0, %s164
      %s165 = sphi 0, %s162
      %s166 = sphi 0, %s165
      %s182 = sphi 0, %s166
    $region4: #{tpu_custom_call.1} parent=1 // loop_header_branch
      %19 = sbr.rel (%p17) target = $region8
    $region5: #{tpu_custom_call.1} parent=1 // loop_body
      %s21 = ssub.s32 %s16, 1
      %s22 = ssub.s32 %s16, 2
      %s29 = sadd.s32 1, %s24
      %p30 = scmp.ge.s32.totalorder %s29, 1
      %s31 = scalar_select %p30, 0, %s29
      %s32 = sadd.s32 1, %s23
      %s33 = scalar_select %p30, %s32, %s23
      %p34 = scmp.ge.s32.totalorder %s33, 2
      %s35 = scalar_select %p34, 0, %s33
      %s36 = ssub.s32 %s23, %s35
      %p37 = scmp.eq.s32.totalorder %s36, 0
      %s39 = sadd.s32 %s38, 1
      %s40 = scalar_select %p37, %s38, %s39
      %p43 = pneg %p37
      %p44 = scmp.eq.s32.totalorder %s16, 1
      %p45 = por %p43, %p44
      %p46 = scmp.ne.s32.totalorder %s38, %s41
      %p47 = scmp.eq.s32.totalorder %s16, 0
      %p48 = por %p46, %p47
      %p49 = scmp.ne.s32.totalorder %s38, %s41
      %p50 = scmp.eq.s32.totalorder %s21, 1
      %p51 = por %p49, %p50
      %p52 = scmp.ne.s32.totalorder %s41, %s42
      %p53 = scmp.eq.s32.totalorder %s21, 0
      %p54 = por %p52, %p53
      %p55 = scmp.ne.s32.totalorder %s41, %s42
      %p56 = scmp.eq.s32.totalorder %s22, 1
      %p57 = por %p55, %p56
      %p59 = scmp.ne.s32.totalorder %s42, %s58
      %p60 = scmp.eq.s32.totalorder %s22, 0
      %p61 = por %p59, %p60
      %s62 = ssub.s32 %s23, %s35
      %p63 = scmp.eq.s32.totalorder %s62, 0
      %s65 = sadd.s32 %s64, 1
      %s66 = scalar_select %p63, %s64, %s65
      %p69 = pneg %p63
      %p70 = scmp.eq.s32.totalorder %s16, 1
      %p71 = por %p69, %p70
      %p72 = scmp.ne.s32.totalorder %s64, %s67
      %p73 = scmp.eq.s32.totalorder %s16, 0
      %p74 = por %p72, %p73
      %p75 = scmp.ne.s32.totalorder %s64, %s67
      %p76 = scmp.eq.s32.totalorder %s21, 1
      %p77 = por %p75, %p76
      %p78 = scmp.ne.s32.totalorder %s67, %s68
      %p79 = scmp.eq.s32.totalorder %s21, 0
      %p80 = por %p78, %p79
      %p81 = scmp.ne.s32.totalorder %s67, %s68
      %p82 = scmp.eq.s32.totalorder %s22, 1
      %p83 = por %p81, %p82
      %p85 = scmp.ne.s32.totalorder %s68, %s84
      %p86 = scmp.eq.s32.totalorder %s22, 0
      %p87 = por %p85, %p86
      %s88 = ssub.s32 %s23, %s35
      %s89 = ssub.s32 %s24, %s31
      %s90 = sor.u32 %s88, %s89
      %p91 = scmp.eq.s32.totalorder %s90, 0
      %s93 = sadd.s32 %s92, 1
      %s94 = scalar_select %p91, %s92, %s93
      %p97 = pneg %p91
      %p98 = scmp.eq.s32.totalorder %s16, 1
      %p99 = por %p97, %p98
      %p100 = scmp.ne.s32.totalorder %s92, %s95
      %p101 = scmp.eq.s32.totalorder %s16, 0
      %p102 = por %p100, %p101
      %p103 = scmp.ne.s32.totalorder %s92, %s95
      %p104 = scmp.eq.s32.totalorder %s21, 1
      %p105 = por %p103, %p104
      %p106 = scmp.ne.s32.totalorder %s95, %s96
      %p107 = scmp.eq.s32.totalorder %s21, 0
      %p108 = por %p106, %p107
      %p109 = scmp.ne.s32.totalorder %s95, %s96
      %p110 = scmp.eq.s32.totalorder %s22, 1
      %p111 = por %p109, %p110
      %p113 = scmp.ne.s32.totalorder %s96, %s112
      %p114 = scmp.eq.s32.totalorder %s22, 0
      %p115 = por %p113, %p114
      %s117 = sadd.s32 %s116, 1
      %p120 = scmp.eq.s32.totalorder %s16, 1
      %p121 = scmp.ne.s32.totalorder %s116, %s118
      %p122 = scmp.eq.s32.totalorder %s16, 0
      %p123 = por %p121, %p122
      %p124 = scmp.ne.s32.totalorder %s116, %s118
      %p125 = scmp.eq.s32.totalorder %s21, 1
      %p126 = por %p124, %p125
      %p127 = scmp.ne.s32.totalorder %s118, %s119
      %p128 = scmp.eq.s32.totalorder %s21, 0
      %p129 = por %p127, %p128
      %p130 = scmp.ne.s32.totalorder %s118, %s119
      %p131 = scmp.eq.s32.totalorder %s22, 1
      %p132 = por %p130, %p131
      %p134 = scmp.ne.s32.totalorder %s119, %s133
      %p135 = scmp.eq.s32.totalorder %s22, 0
      %p136 = por %p134, %p135
      %s138 = sadd.s32 %s137, 1
      %p141 = scmp.eq.s32.totalorder %s16, 1
      %p142 = scmp.ne.s32.totalorder %s137, %s139
      %p143 = scmp.eq.s32.totalorder %s16, 0
      %p144 = por %p142, %p143
      %p145 = scmp.ne.s32.totalorder %s137, %s139
      %p146 = scmp.eq.s32.totalorder %s21, 1
      %p147 = por %p145, %p146
      %p148 = scmp.ne.s32.totalorder %s139, %s140
      %p149 = scmp.eq.s32.totalorder %s21, 0
      %p150 = por %p148, %p149
      %p151 = scmp.ne.s32.totalorder %s139, %s140
      %p152 = scmp.eq.s32.totalorder %s22, 1
      %p153 = por %p151, %p152
      %p155 = scmp.ne.s32.totalorder %s140, %s154
      %p156 = scmp.eq.s32.totalorder %s22, 0
      %p157 = por %p155, %p156
      %s158 = ssub.s32 %s23, %s35
      %s159 = ssub.s32 %s24, %s31
      %s160 = sor.u32 %s158, %s159
      %p161 = scmp.eq.s32.totalorder %s160, 0
      %s163 = sadd.s32 %s162, 1
      %s164 = scalar_select %p161, %s162, %s163
      %p167 = pneg %p161
      %p168 = scmp.eq.s32.totalorder %s16, 1
      %p169 = por %p167, %p168
      %p170 = scmp.ne.s32.totalorder %s162, %s165
      %p171 = scmp.eq.s32.totalorder %s16, 0
      %p172 = por %p170, %p171
      %p173 = scmp.ne.s32.totalorder %s162, %s165
      %p174 = scmp.eq.s32.totalorder %s21, 1
      %p175 = por %p173, %p174
      %p176 = scmp.ne.s32.totalorder %s165, %s166
      %p177 = scmp.eq.s32.totalorder %s21, 0
      %p178 = por %p176, %p177
      %p179 = scmp.ne.s32.totalorder %s165, %s166
      %p180 = scmp.eq.s32.totalorder %s22, 1
      %p181 = por %p179, %p180
      %p183 = scmp.ne.s32.totalorder %s166, %s182
      %p184 = scmp.eq.s32.totalorder %s22, 0
      %p185 = por %p183, %p184
      %p186 = scmp.le.s32.totalorder 1, %s16
      %p187 = scmp.lt.s32.totalorder %s16, 3
      %p188 = pnand %p186, %p187
      %p189 = pneg %p188
      // Predicated region
      $region9: #{tpu_custom_call.1} parent=5 // pred_check
        _
      $region10: #{tpu_custom_call.1} parent=5 // pred_check_branch
        %191 = sbr.rel (%p188) target = $region12
      $region11: #{tpu_custom_call.1} parent=5 // pred_region
        %s192 = ssub.s32 %s16, 1
        // Predicated region
        $region13: #{tpu_custom_call.1} parent=11 // pred_check
          %p193 = pneg %p54
        $region14: #{tpu_custom_call.1} parent=11 // pred_check_branch
          %195 = sbr.rel (%p193) target = $region16
        $region15: #{tpu_custom_call.1} parent=11 // pred_region
          %s197 = ssub.s32 16, 16
          %198 = vsyncadd [#allocation3], %s197
          %s199 = smul.addr %s25, 16
          %s200 = scalar_lea.hbm %s0, %s199
          %s202 = sshll.u32 [#allocation2], 4
          %s203 = int_to_ptr.vmem [resolvable:$true] %s202
          %205 = dma.hbm_to_vmem [thread:$0]  %s200, 16, %s203, [#allocation3]
        $region16: #{tpu_custom_call.1} parent=11 // pred_fallthru
          _
        // Predicated region
        $region17: #{tpu_custom_call.1} parent=11 // pred_check
          %p206 = pneg %p80
        $region18: #{tpu_custom_call.1} parent=11 // pred_check_branch
          %208 = sbr.rel (%p206) target = $region20
        $region19: #{tpu_custom_call.1} parent=11 // pred_region
          %s210 = ssub.s32 16, 16
          %211 = vsyncadd [#allocation6], %s210
          %s212 = smul.addr %s25, 16
          %s213 = scalar_lea.hbm %s1, %s212
          %s215 = sshll.u32 [#allocation5], 4
          %s216 = int_to_ptr.vmem [resolvable:$true] %s215
          %218 = dma.hbm_to_vmem [thread:$0]  %s213, 16, %s216, [#allocation6]
        $region20: #{tpu_custom_call.1} parent=11 // pred_fallthru
          _
        // Predicated region
        $region21: #{tpu_custom_call.1} parent=11 // pred_check
          %p219 = pneg %p129
        $region22: #{tpu_custom_call.1} parent=11 // pred_check_branch
          %221 = sbr.rel (%p219) target = $region24
        $region23: #{tpu_custom_call.1} parent=11 // pred_region
          %s223 = ssub.s32 512, 512
          %224 = vsyncadd [#allocation6], %s223
          %s225 = sshll.u32 [#allocation8], 4
          %s226 = int_to_ptr.vmem [resolvable:$true] %s225
          %231 = dma.hbm_to_vmem [thread:$0]  %s3, 512, %s226, [#allocation6], 128, 128, 8
        $region24: #{tpu_custom_call.1} parent=11 // pred_fallthru
          _
        // Predicated region
        $region25: #{tpu_custom_call.1} parent=11 // pred_check
          %p232 = pneg %p150
        $region26: #{tpu_custom_call.1} parent=11 // pred_check_branch
          %234 = sbr.rel (%p232) target = $region28
        $region27: #{tpu_custom_call.1} parent=11 // pred_region
          _
        $region28: #{tpu_custom_call.1} parent=11 // pred_fallthru
          _
      $region12: #{tpu_custom_call.1} parent=5 // pred_fallthru
        _
      %p235 = scmp.lt.s32.totalorder %s16, 2
      // Predicated region
      $region29: #{tpu_custom_call.1} parent=5 // pred_check
        %p236 = pneg %p235
      $region30: #{tpu_custom_call.1} parent=5 // pred_check_branch
        %238 = sbr.rel (%p236) target = $region32
      $region31: #{tpu_custom_call.1} parent=5 // pred_region
        // Predicated region
        $region33: #{tpu_custom_call.1} parent=31 // pred_check
          %p239 = pneg %p102
        $region34: #{tpu_custom_call.1} parent=31 // pred_check_branch
          %241 = sbr.rel (%p239) target = $region36
        $region35: #{tpu_custom_call.1} parent=31 // pred_region
          %s242 = sand.u32 %s16, 1
          %s243 = scalar_lea.sflag [#allocation3], %s242
          %s244 = sand.u32 %s92, 1
          %s245 = smul.addr %s244, 8
          %s246 = scalar_lea.vmem [#allocation7], %s245
          %s248 = ssub.s32 128, 128
          %249 = vsyncadd %s243, %s248
          %s250 = sadd.s32 %s24, %s23
          %s251 = smul.addr %s250, 128
          %s252 = scalar_lea.hbm %s2, %s251
          %s254 = sshll.u32 %s246, 4
          %s255 = int_to_ptr.vmem [resolvable:$true] %s254
          %257 = dma.hbm_to_vmem [thread:$0]  %s252, 128, %s255, %s243
        $region36: #{tpu_custom_call.1} parent=31 // pred_fallthru
          _
      $region32: #{tpu_custom_call.1} parent=5 // pred_fallthru
        _
      %p258 = scmp.le.s32.totalorder 1, %s16
      %p259 = scmp.lt.s32.totalorder %s16, 3
      %p260 = pnand %p258, %p259
      %p261 = pneg %p260
      // Predicated region
      $region37: #{tpu_custom_call.1} parent=5 // pred_check
        _
      $region38: #{tpu_custom_call.1} parent=5 // pred_check_branch
        %263 = sbr.rel (%p260) target = $region40
      $region39: #{tpu_custom_call.1} parent=5 // pred_region
        %s264 = ssub.s32 %s16, 1
        // Predicated region
        $region41: #{tpu_custom_call.1} parent=39 // pred_check
          %p265 = pneg %p54
        $region42: #{tpu_custom_call.1} parent=39 // pred_check_branch
          %267 = sbr.rel (%p265) target = $region44
        $region43: #{tpu_custom_call.1} parent=39 // pred_region
          %268 = dma.done [#allocation3], 16
        $region44: #{tpu_custom_call.1} parent=39 // pred_fallthru
          _
        // Predicated region
        $region45: #{tpu_custom_call.1} parent=39 // pred_check
          %p269 = pneg %p80
        $region46: #{tpu_custom_call.1} parent=39 // pred_check_branch
          %271 = sbr.rel (%p269) target = $region48
        $region47: #{tpu_custom_call.1} parent=39 // pred_region
          %272 = dma.done [#allocation6], 16
        $region48: #{tpu_custom_call.1} parent=39 // pred_fallthru
          _
        %s273 = sand.u32 %s21, 1
        %s274 = scalar_lea.sflag [#allocation3], %s273
        %s275 = sand.u32 %s95, 1
        %s276 = smul.addr %s275, 8
        %s277 = scalar_lea.vmem [#allocation7], %s276
        // Predicated region
        $region49: #{tpu_custom_call.1} parent=39 // pred_check
          %p278 = pneg %p108
        $region50: #{tpu_custom_call.1} parent=39 // pred_check_branch
          %280 = sbr.rel (%p278) target = $region52
        $region51: #{tpu_custom_call.1} parent=39 // pred_region
          %281 = dma.done %s274, 128
        $region52: #{tpu_custom_call.1} parent=39 // pred_fallthru
          _
        // Predicated region
        $region53: #{tpu_custom_call.1} parent=39 // pred_check
          %p282 = pneg %p129
        $region54: #{tpu_custom_call.1} parent=39 // pred_check_branch
          %284 = sbr.rel (%p282) target = $region56
        $region55: #{tpu_custom_call.1} parent=39 // pred_region
          %285 = dma.done [#allocation6], 512
        $region56: #{tpu_custom_call.1} parent=39 // pred_fallthru
          _
        %p286 = pneg %p54
        %p287 = pneg %p51
        %p288 = pneg %p80
        %p289 = pneg %p77
        %s290 = sand.u32 %s21, 1
        %s291 = scalar_lea.sflag [#allocation3], %s290
        %s292 = sand.u32 %s95, 1
        %s293 = smul.addr %s292, 8
        %s294 = scalar_lea.vmem [#allocation7], %s293
        %p295 = pneg %p108
        %p296 = pneg %p105
        %p297 = pneg %p129
        %p298 = pneg %p126
        %p299 = pneg %p150
        %p300 = pneg %p147
        %p301 = pneg %p178
        %p302 = pneg %p175
        %s303 = sand.u32 %s165, 1
        %s304 = scalar_lea.sflag [#allocation4], %s303
        %s305 = sand.u32 %s165, 1
        %s306 = smul.addr %s305, 8
        %s307 = scalar_lea.vmem [#allocation9], %s306
        %v308 = vld [vmem:[%s277] sm:$0xff]
        %vm309 = vcmask 261120
        %v310 = vsel %vm309, %v308, 0.0
        %311 = vadd.xlane.f32.xlu0 %v310
        %v312 = vpop.xlane.xlu0 %311
        %v313 = vrcp.pop 32.0
        %v314 = vmul.f32 %v312, %v313
        %v315 = vmul.f32 %v308, %v308
        %v316 = vsel %vm309, %v315, 0.0
        %317 = vadd.xlane.f32.xlu0 %v316
        %v318 = vpop.xlane.xlu0 %317
        %v319 = vmul.f32 %v318, %v313
        %v320 = vmul.f32 %v314, %v314
        %v321 = vsub.f32 %v319, %v320
        %v322 = vadd.f32 %v321, 1e-06
        %v323 = vrsqrt.pop %v322
        %v324 = vld [vmem:[#allocation2] sm:$0x1]
        %v325 = vld [vmem:[#allocation5] sm:$0x1]
        %v326 = vsub.f32 %v308, %v314
        %v327 = vmul.f32 %v326, %v323
        %v329 = vlaneseq
        %v330 = vshrl.u32 %v329, 7
        %v331 = vsub.s32 0, %v330
        %v332 = vrot.slane %v325, %v331
        %v334 = vmul.f32 %v327, %v332
        %v336 = vlaneseq
        %v337 = vshrl.u32 %v336, 7
        %v338 = vsub.s32 0, %v337
        %v339 = vrot.slane %v324, %v338
        %v341 = vadd.f32 %v334, %v339
        %v342 = vld [vmem:[#allocation8] sm:$0xff]
        %v343 = vld [vmem:[#allocation8 + $0x8] sm:$0xff]
        %v344 = vld [vmem:[#allocation8 + $0x10] sm:$0xff]
        %v345 = vld [vmem:[#allocation8 + $0x18] sm:$0xff]
        %v346 = vld [vmem:[%s4] sm:$0x1]
        %v348 = vlaneseq
        %v349 = vshrl.u32 %v348, 7
        %v350 = vsub.s32 0, %v349
        %v351 = vrot.slane %v346, %v350
        %v354 = vsel %vm309, %v341, 0
        %356 = vmatprep.subr.mxu0 0.0
        %357 = vmatpush1.msra.mxu0 0.0
        %358 = vmatprep.subr.mxu0 0.0
        %359 = vmatpush1.msra.mxu0 0.0
        %360 = vmatprep.subr.mxu0 0.0
        %361 = vmatpush1.msra.mxu0 0.0
        %362 = vmatprep.subr.mxu0 0.0
        %363 = vmatpush1.msra.mxu0 0.0
        %364 = vmatprep.subr.mxu0 0.0
        %365 = vmatpush1.msra.mxu0 0.0
        %366 = vmatprep.subr.mxu0 0.0
        %367 = vmatpush1.msra.mxu0 0.0
        %368 = vmatprep.subr.mxu0 0.0
        %369 = vmatpush1.msra.mxu0 0.0
        %370 = vmatprep.subr.mxu0 0.0
        %371 = vmatpush1.msra.mxu0 0.0
        %372 = vmatprep.subr.mxu0 0.0
        %373 = vmatpush1.msra.mxu0 0.0
        %374 = vmatprep.subr.mxu0 0.0
        %375 = vmatpush1.msra.mxu0 0.0
        %376 = vmatprep.subr.mxu0 0.0
        %377 = vmatpush1.msra.mxu0 0.0
        %378 = vmatprep.subr.mxu0 0.0
        %379 = vmatpush1.msra.mxu0 0.0
        %380 = vmatprep.subr.mxu0 0.0
        %381 = vmatpush1.msra.mxu0 %v345
        %382 = vmatprep.subr.mxu0 0.0
        %383 = vmatpush1.msra.mxu0 %v344
        %384 = vmatprep.subr.mxu0 0.0
        %385 = vmatpush1.msra.mxu0 %v343
        %386 = vmatprep.subr.mxu0 0.0
        %387 = vmatpush1.msra.mxu0 %v342
        %388 = vmatprep.subr.mxu0 0.0
        %389 = vmatpush2.msra.mxu0 0.0
        %390 = vmatprep.subr.mxu0 0.0
        %391 = vmatpush2.msra.mxu0 0.0
        %392 = vmatprep.subr.mxu0 0.0
        %393 = vmatpush2.msra.mxu0 0.0
        %394 = vmatprep.subr.mxu0 0.0
        %395 = vmatpush2.msra.mxu0 0.0
        %396 = vmatprep.subr.mxu0 0.0
        %397 = vmatpush2.msra.mxu0 0.0
        %398 = vmatprep.subr.mxu0 0.0
        %399 = vmatpush2.msra.mxu0 0.0
        %400 = vmatprep.subr.mxu0 0.0
        %401 = vmatpush2.msra.mxu0 0.0
        %402 = vmatprep.subr.mxu0 0.0
        %403 = vmatpush2.msra.mxu0 0.0
        %404 = vmatprep.subr.mxu0 0.0
        %405 = vmatpush2.msra.mxu0 0.0
        %406 = vmatprep.subr.mxu0 0.0
        %407 = vmatpush2.msra.mxu0 0.0
        %408 = vmatprep.subr.mxu0 0.0
        %409 = vmatpush2.msra.mxu0 0.0
        %410 = vmatprep.subr.mxu0 0.0
        %411 = vmatpush2.msra.mxu0 0.0
        %412 = vmatprep.subr.mxu0 0.0
        %413 = vmatpush2.msra.mxu0 0.0
        %414 = vmatprep.subr.mxu0 0.0
        %415 = vmatpush2.msra.mxu0 0.0
        %416 = vmatprep.subr.mxu0 0.0
        %417 = vmatpush2.msra.mxu0 0.0
        %418 = vmatprep.subr.mxu0 0.0
        %419 = vmatpush2.msra.mxu0 0.0
        %420 = vmatprep.mubr.f32.mxu0 0.0
        %421 = vmatmul.mubr.f32.gmra.mxu0 %v354
        %v422 = vpop.f32.mrf.mxu0
        %v423 = vadd.f32 %v351, %v422
        %v424 = vpop.f32.mrf.mxu0
        %425 = vdwg.mxu0
        %426 = vst [vmem:[%s307] sm:$0xff] %v423
        %s427 = sand.u32 %s165, 1
        %s428 = scalar_lea.sflag [#allocation4], %s427
        %s429 = sand.u32 %s165, 1
        %s430 = smul.addr %s429, 8
        %s431 = scalar_lea.vmem [#allocation9], %s430
        // Predicated region
        $region57: #{tpu_custom_call.1} parent=39 // pred_check
          %p432 = pneg %p175
        $region58: #{tpu_custom_call.1} parent=39 // pred_check_branch
          %434 = sbr.rel (%p432) target = $region60
        $region59: #{tpu_custom_call.1} parent=39 // pred_region
          %s436 = ssub.s32 128, 128
          %437 = vsyncadd %s428, %s436
          %s438 = sadd.s32 %s26, %s25
          %s439 = smul.addr %s438, 128
          %s440 = scalar_lea.hbm %s5, %s439
          %s442 = sshll.u32 %s431, 4
          %s443 = int_to_ptr.vmem [resolvable:$true] %s442
          %445 = dma.vmem_to_hbm [thread:$0]  %s443, 128, %s440, %s428
        $region60: #{tpu_custom_call.1} parent=39 // pred_fallthru
          _
      $region40: #{tpu_custom_call.1} parent=5 // pred_fallthru
        _
      %p446 = scmp.le.s32.totalorder 2, %s16
      // Predicated region
      $region61: #{tpu_custom_call.1} parent=5 // pred_check
        %p447 = pneg %p446
      $region62: #{tpu_custom_call.1} parent=5 // pred_check_branch
        %449 = sbr.rel (%p447) target = $region64
      $region63: #{tpu_custom_call.1} parent=5 // pred_region
        %s450 = ssub.s32 %s16, 2
        // Predicated region
        $region65: #{tpu_custom_call.1} parent=63 // pred_check
          %p451 = pneg %p181
        $region66: #{tpu_custom_call.1} parent=63 // pred_check_branch
          %453 = sbr.rel (%p451) target = $region68
        $region67: #{tpu_custom_call.1} parent=63 // pred_region
          %s454 = sand.u32 %s166, 1
          %s455 = scalar_lea.sflag [#allocation4], %s454
          %s456 = sand.u32 %s166, 1
          %s457 = smul.addr %s456, 8
          %s458 = scalar_lea.vmem [#allocation9], %s457
          %459 = dma.done %s455, 128
        $region68: #{tpu_custom_call.1} parent=63 // pred_fallthru
          _
      $region64: #{tpu_custom_call.1} parent=5 // pred_fallthru
        _
    $region6: #{tpu_custom_call.1} parent=1 // loop_footer
      %s20 = sadd.s32 1, %s16
    $region7: #{tpu_custom_call.1} parent=1 // loop_footer_branch
      %15 = sbr.rel target = $region3
    $region8: #{tpu_custom_call.1} parent=1 // loop_exit
      _
    %460 = vsyncpa [#allocation3], 1
    %s461 = scalar_lea.sflag [#allocation3], 1
    %462 = vsyncpa %s461, 1
    %463 = vsyncpa [#allocation6], 1
    %464 = vsyncpa [#allocation4], 1
    %s465 = scalar_lea.sflag [#allocation4], 1
    %466 = vsyncpa %s465, 1

// kernel: tpu_custom_call.1
$region0: #{tpu_custom_call.1}
  #allocation0 [shape = 'u32[]', space=smem, size = 0x4, offset = 0x4, fixed_abs, tag = 'smem constant byte address 0x4 - core index']
  #allocation1 [shape = 'u32[144,128]{1,0:T(1,128)}', space=vmem, size = 0x12000, scoped, tag = 'internal scratch']
  %s0 = inlined_call_operand.hbm [shape: f32[2,1,32], index: 0, kind: input, shape index: {}]
  %s1 = inlined_call_operand.hbm [shape: f32[2,1,32], index: 1, kind: input, shape index: {}]
  %s2 = inlined_call_operand.hbm [shape: f32[2,8,32], index: 2, kind: input, shape index: {}]
  %s3 = inlined_call_operand.hbm [shape: f32[32,128], index: 3, kind: input, shape index: {}]
  %s4 = inlined_call_operand.vmem [shape: f32[1,128], index: 4, kind: input, shape index: {}]
  %s5 = inlined_call_operand.hbm [shape: f32[2,8,128], index: 5, kind: output, shape index: {}]
  %s6 = sld [smem:[#allocation0]]
  $region69: #{tpu_custom_call.1} parent=0
    _
  %s8 = ssub.s32 1, %s6
  %s9 = scalar_select 0, %s8, %s6
  $region1: #{tpu_custom_call.1} parent=0
    #allocation2 [shape = 'u8[1024]{0}', space=vmem, size = 0x400, scoped, tag = 'input window, operand 0']
    #allocation3 [shape = 's32[2]{0}', space=sflag, size = 0x8, scoped, tag = 'scoped memory for tpu_custom_call.1']
    #allocation4 [shape = 's32[2]{0}', space=sflag, size = 0x8, scoped, tag = 'scoped memory for tpu_custom_call.1']
    #allocation5 [shape = 'u8[1024]{0}', space=vmem, size = 0x400, scoped, tag = 'input window, operand 1']
    #allocation6 [shape = 's32[2]{0}', space=sflag, size = 0x8, scoped, tag = 'scoped memory for tpu_custom_call.1']
    #allocation7 [shape = 'u8[8192]{0}', space=vmem, size = 0x2000, scoped, tag = 'input window, operand 2']
    #allocation8 [shape = 'u8[16384]{0}', space=vmem, size = 0x4000, scoped, tag = 'input window, operand 3, single buffered']
    #allocation9 [shape = 's32[1]{0}', space=sflag, size = 0x4, scoped, tag = 'scoped memory for tpu_custom_call.1']
    #allocation10 [shape = 'u8[8192]{0}', space=vmem, size = 0x2000, scoped, tag = 'output window, operand 0']
    %10 = vsyncpa [#allocation3], 0
    %s11 = scalar_lea.sflag [#allocation3], 1
    %12 = vsyncpa %s11, 0
    %13 = vsyncpa [#allocation6], 0
    %s14 = scalar_lea.sflag [#allocation6], 1
    %15 = vsyncpa %s14, 0
    %16 = vsyncpa [#allocation9], 0
    %17 = vsyncpa [#allocation4], 0
    %s18 = scalar_lea.sflag [#allocation4], 1
    %19 = vsyncpa %s18, 0
    loop: start=0, step=1, limit=4
    $region2: #{tpu_custom_call.1} parent=1 // loop_pre_header
      _
    $region3: #{tpu_custom_call.1} parent=1 // loop_header
      %s21 = sphi 0, %s25
      %p22 = scmp.ge.s32.totalorder %s21, 4
      %s28 = sphi 0, %s40
      %s29 = sphi 0, %s36
      %s30 = sphi 0, %s28
      %s31 = sphi 0, %s29
      %s32 = sphi 0, %s30
      %s33 = sphi 0, %s31
      %s43 = sphi 0, %s45
      %s46 = sphi 0, %s43
      %s47 = sphi 0, %s46
      %s63 = sphi 0, %s47
      %s69 = sphi 0, %s71
      %s72 = sphi 0, %s69
      %s73 = sphi 0, %s72
      %s89 = sphi 0, %s73
      %s97 = sphi 0, %s99
      %s100 = sphi 0, %s97
      %s101 = sphi 0, %s100
      %s117 = sphi 0, %s101
      %s121 = sphi 0, %s121
      %s123 = sphi 0, %s121
      %s124 = sphi 0, %s123
      %s138 = sphi 0, %s124
      %s142 = sphi 0, %s142
      %s144 = sphi 0, %s142
      %s145 = sphi 0, %s144
      %s159 = sphi 0, %s145
      %s167 = sphi 0, %s169
      %s170 = sphi 0, %s167
      %s171 = sphi 0, %s170
      %s187 = sphi 0, %s171
    $region4: #{tpu_custom_call.1} parent=1 // loop_header_branch
      %24 = sbr.rel (%p22) target = $region8
    $region5: #{tpu_custom_call.1} parent=1 // loop_body
      %s26 = ssub.s32 %s21, 1
      %s27 = ssub.s32 %s21, 2
      %s34 = sadd.s32 1, %s29
      %p35 = scmp.ge.s32.totalorder %s34, 1
      %s36 = scalar_select %p35, 0, %s34
      %s37 = sadd.s32 1, %s28
      %s38 = scalar_select %p35, %s37, %s28
      %p39 = scmp.ge.s32.totalorder %s38, 2
      %s40 = scalar_select %p39, 0, %s38
      %s41 = ssub.s32 %s28, %s40
      %p42 = scmp.eq.s32.totalorder %s41, 0
      %s44 = sadd.s32 %s43, 1
      %s45 = scalar_select %p42, %s43, %s44
      %p48 = pneg %p42
      %p49 = scmp.eq.s32.totalorder %s21, 1
      %p50 = por %p48, %p49
      %p51 = scmp.ne.s32.totalorder %s43, %s46
      %p52 = scmp.eq.s32.totalorder %s21, 0
      %p53 = por %p51, %p52
      %p54 = scmp.ne.s32.totalorder %s43, %s46
      %p55 = scmp.eq.s32.totalorder %s26, 1
      %p56 = por %p54, %p55
      %p57 = scmp.ne.s32.totalorder %s46, %s47
      %p58 = scmp.eq.s32.totalorder %s26, 0
      %p59 = por %p57, %p58
      %p60 = scmp.ne.s32.totalorder %s46, %s47
      %p61 = scmp.eq.s32.totalorder %s27, 1
      %p62 = por %p60, %p61
      %p64 = scmp.ne.s32.totalorder %s47, %s63
      %p65 = scmp.eq.s32.totalorder %s27, 0
      %p66 = por %p64, %p65
      %s67 = ssub.s32 %s28, %s40
      %p68 = scmp.eq.s32.totalorder %s67, 0
      %s70 = sadd.s32 %s69, 1
      %s71 = scalar_select %p68, %s69, %s70
      %p74 = pneg %p68
      %p75 = scmp.eq.s32.totalorder %s21, 1
      %p76 = por %p74, %p75
      %p77 = scmp.ne.s32.totalorder %s69, %s72
      %p78 = scmp.eq.s32.totalorder %s21, 0
      %p79 = por %p77, %p78
      %p80 = scmp.ne.s32.totalorder %s69, %s72
      %p81 = scmp.eq.s32.totalorder %s26, 1
      %p82 = por %p80, %p81
      %p83 = scmp.ne.s32.totalorder %s72, %s73
      %p84 = scmp.eq.s32.totalorder %s26, 0
      %p85 = por %p83, %p84
      %p86 = scmp.ne.s32.totalorder %s72, %s73
      %p87 = scmp.eq.s32.totalorder %s27, 1
      %p88 = por %p86, %p87
      %p90 = scmp.ne.s32.totalorder %s73, %s89
      %p91 = scmp.eq.s32.totalorder %s27, 0
      %p92 = por %p90, %p91
      %s93 = ssub.s32 %s28, %s40
      %s94 = ssub.s32 %s29, %s36
      %s95 = sor.u32 %s93, %s94
      %p96 = scmp.eq.s32.totalorder %s95, 0
      %s98 = sadd.s32 %s97, 1
      %s99 = scalar_select %p96, %s97, %s98
      %p102 = pneg %p96
      %p103 = scmp.eq.s32.totalorder %s21, 1
      %p104 = por %p102, %p103
      %p105 = scmp.ne.s32.totalorder %s97, %s100
      %p106 = scmp.eq.s32.totalorder %s21, 0
      %p107 = por %p105, %p106
      %p108 = scmp.ne.s32.totalorder %s97, %s100
      %p109 = scmp.eq.s32.totalorder %s26, 1
      %p110 = por %p108, %p109
      %p111 = scmp.ne.s32.totalorder %s100, %s101
      %p112 = scmp.eq.s32.totalorder %s26, 0
      %p113 = por %p111, %p112
      %p114 = scmp.ne.s32.totalorder %s100, %s101
      %p115 = scmp.eq.s32.totalorder %s27, 1
      %p116 = por %p114, %p115
      %p118 = scmp.ne.s32.totalorder %s101, %s117
      %p119 = scmp.eq.s32.totalorder %s27, 0
      %p120 = por %p118, %p119
      %s122 = sadd.s32 %s121, 1
      %p125 = scmp.eq.s32.totalorder %s21, 1
      %p126 = scmp.ne.s32.totalorder %s121, %s123
      %p127 = scmp.eq.s32.totalorder %s21, 0
      %p128 = por %p126, %p127
      %p129 = scmp.ne.s32.totalorder %s121, %s123
      %p130 = scmp.eq.s32.totalorder %s26, 1
      %p131 = por %p129, %p130
      %p132 = scmp.ne.s32.totalorder %s123, %s124
      %p133 = scmp.eq.s32.totalorder %s26, 0
      %p134 = por %p132, %p133
      %p135 = scmp.ne.s32.totalorder %s123, %s124
      %p136 = scmp.eq.s32.totalorder %s27, 1
      %p137 = por %p135, %p136
      %p139 = scmp.ne.s32.totalorder %s124, %s138
      %p140 = scmp.eq.s32.totalorder %s27, 0
      %p141 = por %p139, %p140
      %s143 = sadd.s32 %s142, 1
      %p146 = scmp.eq.s32.totalorder %s21, 1
      %p147 = scmp.ne.s32.totalorder %s142, %s144
      %p148 = scmp.eq.s32.totalorder %s21, 0
      %p149 = por %p147, %p148
      %p150 = scmp.ne.s32.totalorder %s142, %s144
      %p151 = scmp.eq.s32.totalorder %s26, 1
      %p152 = por %p150, %p151
      %p153 = scmp.ne.s32.totalorder %s144, %s145
      %p154 = scmp.eq.s32.totalorder %s26, 0
      %p155 = por %p153, %p154
      %p156 = scmp.ne.s32.totalorder %s144, %s145
      %p157 = scmp.eq.s32.totalorder %s27, 1
      %p158 = por %p156, %p157
      %p160 = scmp.ne.s32.totalorder %s145, %s159
      %p161 = scmp.eq.s32.totalorder %s27, 0
      %p162 = por %p160, %p161
      %s163 = ssub.s32 %s28, %s40
      %s164 = ssub.s32 %s29, %s36
      %s165 = sor.u32 %s163, %s164
      %p166 = scmp.eq.s32.totalorder %s165, 0
      %s168 = sadd.s32 %s167, 1
      %s169 = scalar_select %p166, %s167, %s168
      %p172 = pneg %p166
      %p173 = scmp.eq.s32.totalorder %s21, 1
      %p174 = por %p172, %p173
      %p175 = scmp.ne.s32.totalorder %s167, %s170
      %p176 = scmp.eq.s32.totalorder %s21, 0
      %p177 = por %p175, %p176
      %p178 = scmp.ne.s32.totalorder %s167, %s170
      %p179 = scmp.eq.s32.totalorder %s26, 1
      %p180 = por %p178, %p179
      %p181 = scmp.ne.s32.totalorder %s170, %s171
      %p182 = scmp.eq.s32.totalorder %s26, 0
      %p183 = por %p181, %p182
      %p184 = scmp.ne.s32.totalorder %s170, %s171
      %p185 = scmp.eq.s32.totalorder %s27, 1
      %p186 = por %p184, %p185
      %p188 = scmp.ne.s32.totalorder %s171, %s187
      %p189 = scmp.eq.s32.totalorder %s27, 0
      %p190 = por %p188, %p189
      %p191 = scmp.le.s32.totalorder 1, %s21
      %p192 = scmp.lt.s32.totalorder %s21, 3
      %p193 = pnand %p191, %p192
      %p194 = pneg %p193
      // Predicated region
      $region9: #{tpu_custom_call.1} parent=5 // pred_check
        _
      $region10: #{tpu_custom_call.1} parent=5 // pred_check_branch
        %196 = sbr.rel (%p193) target = $region12
      $region11: #{tpu_custom_call.1} parent=5 // pred_region
        %s197 = ssub.s32 %s21, 1
        // Predicated region
        $region13: #{tpu_custom_call.1} parent=11 // pred_check
          %p198 = pneg %p134
        $region14: #{tpu_custom_call.1} parent=11 // pred_check_branch
          %200 = sbr.rel (%p198) target = $region16
        $region15: #{tpu_custom_call.1} parent=11 // pred_region
          %s202 = ssub.s32 512, 512
          %203 = vsyncadd [#allocation9], %s202
          %s204 = sshll.u32 [#allocation8], 4
          %s205 = int_to_ptr.vmem [resolvable:$true] %s204
          %210 = dma.hbm_to_vmem [thread:$0]  %s3, 512, %s205, [#allocation9], 128, 128, 8
        $region16: #{tpu_custom_call.1} parent=11 // pred_fallthru
          _
        // Predicated region
        $region17: #{tpu_custom_call.1} parent=11 // pred_check
          %p211 = pneg %p155
        $region18: #{tpu_custom_call.1} parent=11 // pred_check_branch
          %213 = sbr.rel (%p211) target = $region20
        $region19: #{tpu_custom_call.1} parent=11 // pred_region
          _
        $region20: #{tpu_custom_call.1} parent=11 // pred_fallthru
          _
      $region12: #{tpu_custom_call.1} parent=5 // pred_fallthru
        _
      %p214 = scmp.lt.s32.totalorder %s21, 2
      // Predicated region
      $region21: #{tpu_custom_call.1} parent=5 // pred_check
        %p215 = pneg %p214
      $region22: #{tpu_custom_call.1} parent=5 // pred_check_branch
        %217 = sbr.rel (%p215) target = $region24
      $region23: #{tpu_custom_call.1} parent=5 // pred_region
        // Predicated region
        $region25: #{tpu_custom_call.1} parent=23 // pred_check
          %p218 = pneg %p53
        $region26: #{tpu_custom_call.1} parent=23 // pred_check_branch
          %220 = sbr.rel (%p218) target = $region28
        $region27: #{tpu_custom_call.1} parent=23 // pred_region
          %s221 = sand.u32 %s43, 1
          %s222 = scalar_lea.sflag [#allocation3], %s221
          %s223 = sand.u32 %s43, 1
          %s224 = scalar_lea.vmem [#allocation2], %s223
          %s226 = ssub.s32 16, 16
          %227 = vsyncadd %s222, %s226
          %s228 = smul.addr %s28, 16
          %s229 = scalar_lea.hbm %s0, %s228
          %s231 = sshll.u32 %s224, 4
          %s232 = int_to_ptr.vmem [resolvable:$true] %s231
          %234 = dma.hbm_to_vmem [thread:$0]  %s229, 16, %s232, %s222
        $region28: #{tpu_custom_call.1} parent=23 // pred_fallthru
          _
        // Predicated region
        $region29: #{tpu_custom_call.1} parent=23 // pred_check
          %p235 = pneg %p79
        $region30: #{tpu_custom_call.1} parent=23 // pred_check_branch
          %237 = sbr.rel (%p235) target = $region32
        $region31: #{tpu_custom_call.1} parent=23 // pred_region
          %s238 = sand.u32 %s21, 1
          %s239 = scalar_lea.sflag [#allocation6], %s238
          %s240 = sand.u32 %s69, 1
          %s241 = scalar_lea.vmem [#allocation5], %s240
          %s243 = ssub.s32 16, 16
          %244 = vsyncadd %s239, %s243
          %s245 = smul.addr %s28, 16
          %s246 = scalar_lea.hbm %s1, %s245
          %s248 = sshll.u32 %s241, 4
          %s249 = int_to_ptr.vmem [resolvable:$true] %s248
          %251 = dma.hbm_to_vmem [thread:$0]  %s246, 16, %s249, %s239
        $region32: #{tpu_custom_call.1} parent=23 // pred_fallthru
          _
        // Predicated region
        $region33: #{tpu_custom_call.1} parent=23 // pred_check
          %p252 = pneg %p107
        $region34: #{tpu_custom_call.1} parent=23 // pred_check_branch
          %254 = sbr.rel (%p252) target = $region36
        $region35: #{tpu_custom_call.1} parent=23 // pred_region
          %s255 = sand.u32 %s21, 1
          %s256 = scalar_lea.sflag [#allocation6], %s255
          %s257 = sand.u32 %s97, 1
          %s258 = smul.addr %s257, 8
          %s259 = scalar_lea.vmem [#allocation7], %s258
          %s261 = ssub.s32 128, 128
          %262 = vsyncadd %s256, %s261
          %s263 = sadd.s32 %s29, %s28
          %s264 = smul.addr %s263, 128
          %s265 = scalar_lea.hbm %s2, %s264
          %s267 = sshll.u32 %s259, 4
          %s268 = int_to_ptr.vmem [resolvable:$true] %s267
          %270 = dma.hbm_to_vmem [thread:$0]  %s265, 128, %s268, %s256
        $region36: #{tpu_custom_call.1} parent=23 // pred_fallthru
          _
      $region24: #{tpu_custom_call.1} parent=5 // pred_fallthru
        _
      %p271 = scmp.le.s32.totalorder 1, %s21
      %p272 = scmp.lt.s32.totalorder %s21, 3
      %p273 = pnand %p271, %p272
      %p274 = pneg %p273
      // Predicated region
      $region37: #{tpu_custom_call.1} parent=5 // pred_check
        _
      $region38: #{tpu_custom_call.1} parent=5 // pred_check_branch
        %276 = sbr.rel (%p273) target = $region40
      $region39: #{tpu_custom_call.1} parent=5 // pred_region
        %s277 = ssub.s32 %s21, 1
        %s278 = sand.u32 %s46, 1
        %s279 = scalar_lea.sflag [#allocation3], %s278
        %s280 = sand.u32 %s46, 1
        %s281 = scalar_lea.vmem [#allocation2], %s280
        // Predicated region
        $region41: #{tpu_custom_call.1} parent=39 // pred_check
          %p282 = pneg %p59
        $region42: #{tpu_custom_call.1} parent=39 // pred_check_branch
          %284 = sbr.rel (%p282) target = $region44
        $region43: #{tpu_custom_call.1} parent=39 // pred_region
          %285 = dma.done %s279, 16
        $region44: #{tpu_custom_call.1} parent=39 // pred_fallthru
          _
        %s286 = sand.u32 %s26, 1
        %s287 = scalar_lea.sflag [#allocation6], %s286
        %s288 = sand.u32 %s72, 1
        %s289 = scalar_lea.vmem [#allocation5], %s288
        // Predicated region
        $region45: #{tpu_custom_call.1} parent=39 // pred_check
          %p290 = pneg %p85
        $region46: #{tpu_custom_call.1} parent=39 // pred_check_branch
          %292 = sbr.rel (%p290) target = $region48
        $region47: #{tpu_custom_call.1} parent=39 // pred_region
          %293 = dma.done %s287, 16
        $region48: #{tpu_custom_call.1} parent=39 // pred_fallthru
          _
        %s294 = sand.u32 %s26, 1
        %s295 = scalar_lea.sflag [#allocation6], %s294
        %s296 = sand.u32 %s100, 1
        %s297 = smul.addr %s296, 8
        %s298 = scalar_lea.vmem [#allocation7], %s297
        // Predicated region
        $region49: #{tpu_custom_call.1} parent=39 // pred_check
          %p299 = pneg %p113
        $region50: #{tpu_custom_call.1} parent=39 // pred_check_branch
          %301 = sbr.rel (%p299) target = $region52
        $region51: #{tpu_custom_call.1} parent=39 // pred_region
          %302 = dma.done %s295, 128
        $region52: #{tpu_custom_call.1} parent=39 // pred_fallthru
          _
        // Predicated region
        $region53: #{tpu_custom_call.1} parent=39 // pred_check
          %p303 = pneg %p134
        $region54: #{tpu_custom_call.1} parent=39 // pred_check_branch
          %305 = sbr.rel (%p303) target = $region56
        $region55: #{tpu_custom_call.1} parent=39 // pred_region
          %306 = dma.done [#allocation9], 512
        $region56: #{tpu_custom_call.1} parent=39 // pred_fallthru
          _
        %s307 = sand.u32 %s46, 1
        %s308 = scalar_lea.sflag [#allocation3], %s307
        %s309 = sand.u32 %s46, 1
        %s310 = scalar_lea.vmem [#allocation2], %s309
        %p311 = pneg %p59
        %p312 = pneg %p56
        %s313 = sand.u32 %s26, 1
        %s314 = scalar_lea.sflag [#allocation6], %s313
        %s315 = sand.u32 %s72, 1
        %s316 = scalar_lea.vmem [#allocation5], %s315
        %p317 = pneg %p85
        %p318 = pneg %p82
        %s319 = sand.u32 %s26, 1
        %s320 = scalar_lea.sflag [#allocation6], %s319
        %s321 = sand.u32 %s100, 1
        %s322 = smul.addr %s321, 8
        %s323 = scalar_lea.vmem [#allocation7], %s322
        %p324 = pneg %p113
        %p325 = pneg %p110
        %p326 = pneg %p134
        %p327 = pneg %p131
        %p328 = pneg %p155
        %p329 = pneg %p152
        %p330 = pneg %p183
        %p331 = pneg %p180
        %s332 = sand.u32 %s170, 1
        %s333 = scalar_lea.sflag [#allocation4], %s332
        %s334 = sand.u32 %s170, 1
        %s335 = smul.addr %s334, 8
        %s336 = scalar_lea.vmem [#allocation10], %s335
        %v337 = vld [vmem:[%s298] sm:$0xff]
        %vm338 = vcmask 261120
        %v339 = vsel %vm338, %v337, 0.0
        %340 = vadd.xlane.f32.xlu0 %v339
        %v341 = vpop.xlane.xlu0 %340
        %v342 = vrcp.pop 32.0
        %v343 = vmul.f32 %v341, %v342
        %v344 = vmul.f32 %v337, %v337
        %v345 = vsel %vm338, %v344, 0.0
        %346 = vadd.xlane.f32.xlu0 %v345
        %v347 = vpop.xlane.xlu0 %346
        %v348 = vmul.f32 %v347, %v342
        %v349 = vmul.f32 %v343, %v343
        %v350 = vsub.f32 %v348, %v349
        %v351 = vadd.f32 %v350, 1e-06
        %v352 = vrsqrt.pop %v351
        %v353 = vld [vmem:[%s281] sm:$0x1]
        %v354 = vld [vmem:[%s289] sm:$0x1]
        %v355 = vsub.f32 %v337, %v343
        %v356 = vmul.f32 %v355, %v352
        %v358 = vlaneseq
        %v359 = vshrl.u32 %v358, 7
        %v360 = vsub.s32 0, %v359
        %v361 = vrot.slane %v354, %v360
        %v363 = vmul.f32 %v356, %v361
        %v365 = vlaneseq
        %v366 = vshrl.u32 %v365, 7
        %v367 = vsub.s32 0, %v366
        %v368 = vrot.slane %v353, %v367
        %v370 = vadd.f32 %v363, %v368
        %v371 = vld [vmem:[#allocation8] sm:$0xff]
        %v372 = vld [vmem:[#allocation8 + $0x8] sm:$0xff]
        %v373 = vld [vmem:[#allocation8 + $0x10] sm:$0xff]
        %v374 = vld [vmem:[#allocation8 + $0x18] sm:$0xff]
        %v375 = vld [vmem:[%s4] sm:$0x1]
        %v377 = vlaneseq
        %v378 = vshrl.u32 %v377, 7
        %v379 = vsub.s32 0, %v378
        %v380 = vrot.slane %v375, %v379
        %v383 = vsel %vm338, %v370, 0
        %385 = vmatprep.subr.mxu0 0.0
        %386 = vmatpush1.msra.mxu0 0.0
        %387 = vmatprep.subr.mxu0 0.0
        %388 = vmatpush1.msra.mxu0 0.0
        %389 = vmatprep.subr.mxu0 0.0
        %390 = vmatpush1.msra.mxu0 0.0
        %391 = vmatprep.subr.mxu0 0.0
        %392 = vmatpush1.msra.mxu0 0.0
        %393 = vmatprep.subr.mxu0 0.0
        %394 = vmatpush1.msra.mxu0 0.0
        %395 = vmatprep.subr.mxu0 0.0
        %396 = vmatpush1.msra.mxu0 0.0
        %397 = vmatprep.subr.mxu0 0.0
        %398 = vmatpush1.msra.mxu0 0.0
        %399 = vmatprep.subr.mxu0 0.0
        %400 = vmatpush1.msra.mxu0 0.0
        %401 = vmatprep.subr.mxu0 0.0
        %402 = vmatpush1.msra.mxu0 0.0
        %403 = vmatprep.subr.mxu0 0.0
        %404 = vmatpush1.msra.mxu0 0.0
        %405 = vmatprep.subr.mxu0 0.0
        %406 = vmatpush1.msra.mxu0 0.0
        %407 = vmatprep.subr.mxu0 0.0
        %408 = vmatpush1.msra.mxu0 0.0
        %409 = vmatprep.subr.mxu0 0.0
        %410 = vmatpush1.msra.mxu0 %v374
        %411 = vmatprep.subr.mxu0 0.0
        %412 = vmatpush1.msra.mxu0 %v373
        %413 = vmatprep.subr.mxu0 0.0
        %414 = vmatpush1.msra.mxu0 %v372
        %415 = vmatprep.subr.mxu0 0.0
        %416 = vmatpush1.msra.mxu0 %v371
        %417 = vmatprep.subr.mxu0 0.0
        %418 = vmatpush2.msra.mxu0 0.0
        %419 = vmatprep.subr.mxu0 0.0
        %420 = vmatpush2.msra.mxu0 0.0
        %421 = vmatprep.subr.mxu0 0.0
        %422 = vmatpush2.msra.mxu0 0.0
        %423 = vmatprep.subr.mxu0 0.0
        %424 = vmatpush2.msra.mxu0 0.0
        %425 = vmatprep.subr.mxu0 0.0
        %426 = vmatpush2.msra.mxu0 0.0
        %427 = vmatprep.subr.mxu0 0.0
        %428 = vmatpush2.msra.mxu0 0.0
        %429 = vmatprep.subr.mxu0 0.0
        %430 = vmatpush2.msra.mxu0 0.0
        %431 = vmatprep.subr.mxu0 0.0
        %432 = vmatpush2.msra.mxu0 0.0
        %433 = vmatprep.subr.mxu0 0.0
        %434 = vmatpush2.msra.mxu0 0.0
        %435 = vmatprep.subr.mxu0 0.0
        %436 = vmatpush2.msra.mxu0 0.0
        %437 = vmatprep.subr.mxu0 0.0
        %438 = vmatpush2.msra.mxu0 0.0
        %439 = vmatprep.subr.mxu0 0.0
        %440 = vmatpush2.msra.mxu0 0.0
        %441 = vmatprep.subr.mxu0 0.0
        %442 = vmatpush2.msra.mxu0 0.0
        %443 = vmatprep.subr.mxu0 0.0
        %444 = vmatpush2.msra.mxu0 0.0
        %445 = vmatprep.subr.mxu0 0.0
        %446 = vmatpush2.msra.mxu0 0.0
        %447 = vmatprep.subr.mxu0 0.0
        %448 = vmatpush2.msra.mxu0 0.0
        %449 = vmatprep.mubr.f32.mxu0 0.0
        %450 = vmatmul.mubr.f32.gmra.mxu0 %v383
        %v451 = vpop.f32.mrf.mxu0
        %v452 = vadd.f32 %v380, %v451
        %v453 = vpop.f32.mrf.mxu0
        %454 = vdwg.mxu0
        %455 = vst [vmem:[%s336] sm:$0xff] %v452
        %s456 = sand.u32 %s170, 1
        %s457 = scalar_lea.sflag [#allocation4], %s456
        %s458 = sand.u32 %s170, 1
        %s459 = smul.addr %s458, 8
        %s460 = scalar_lea.vmem [#allocation10], %s459
        // Predicated region
        $region57: #{tpu_custom_call.1} parent=39 // pred_check
          %p461 = pneg %p180
        $region58: #{tpu_custom_call.1} parent=39 // pred_check_branch
          %463 = sbr.rel (%p461) target = $region60
        $region59: #{tpu_custom_call.1} parent=39 // pred_region
          %s465 = ssub.s32 128, 128
          %466 = vsyncadd %s457, %s465
          %s467 = sadd.s32 %s31, %s30
          %s468 = smul.addr %s467, 128
          %s469 = scalar_lea.hbm %s5, %s468
          %s471 = sshll.u32 %s460, 4
          %s472 = int_to_ptr.vmem [resolvable:$true] %s471
          %474 = dma.vmem_to_hbm [thread:$0]  %s472, 128, %s469, %s457
        $region60: #{tpu_custom_call.1} parent=39 // pred_fallthru
          _
      $region40: #{tpu_custom_call.1} parent=5 // pred_fallthru
        _
      %p475 = scmp.le.s32.totalorder 2, %s21
      // Predicated region
      $region61: #{tpu_custom_call.1} parent=5 // pred_check
        %p476 = pneg %p475
      $region62: #{tpu_custom_call.1} parent=5 // pred_check_branch
        %478 = sbr.rel (%p476) target = $region64
      $region63: #{tpu_custom_call.1} parent=5 // pred_region
        %s479 = ssub.s32 %s21, 2
        // Predicated region
        $region65: #{tpu_custom_call.1} parent=63 // pred_check
          %p480 = pneg %p186
        $region66: #{tpu_custom_call.1} parent=63 // pred_check_branch
          %482 = sbr.rel (%p480) target = $region68
        $region67: #{tpu_custom_call.1} parent=63 // pred_region
          %s483 = sand.u32 %s171, 1
          %s484 = scalar_lea.sflag [#allocation4], %s483
          %s485 = sand.u32 %s171, 1
          %s486 = smul.addr %s485, 8
          %s487 = scalar_lea.vmem [#allocation10], %s486
          %488 = dma.done %s484, 128
        $region68: #{tpu_custom_call.1} parent=63 // pred_fallthru
          _
      $region64: #{tpu_custom_call.1} parent=5 // pred_fallthru
        _
    $region6: #{tpu_custom_call.1} parent=1 // loop_footer
      %s25 = sadd.s32 1, %s21
    $region7: #{tpu_custom_call.1} parent=1 // loop_footer_branch
      %20 = sbr.rel target = $region3
    $region8: #{tpu_custom_call.1} parent=1 // loop_exit
      _
    %489 = vsyncpa [#allocation3], 1
    %s490 = scalar_lea.sflag [#allocation3], 1
    %491 = vsyncpa %s490, 1
    %492 = vsyncpa [#allocation6], 1
    %s493 = scalar_lea.sflag [#allocation6], 1
    %494 = vsyncpa %s493, 1
    %495 = vsyncpa [#allocation9], 1
    %496 = vsyncpa [#allocation4], 1
    %s497 = scalar_lea.sflag [#allocation4], 1
    %498 = vsyncpa %s497, 1

</llo_original>
